<compile_context>
chip_gen: v7x
topology: tpu7x:2x2x1
jax: 0.10.0
libtpu: 0.0.40
codegen_flags: <defaults>
</compile_context>

<pallas_src>
import jax
import jax.numpy as jnp
from jax.experimental import pallas as pl
from jax.experimental.pallas import tpu as pltpu


def _mlp_kernel(x_ref, w1_ref, b1_ref, w2_ref, b2_ref, w3_ref, b3_ref, out_ref):
    # Batch is on the lane (last) axis of every tensor in here.
    x_t = x_ref[...]                                              # (6, TB)

    # Linear(6, 36) + ReLU   (MXU, f32 accumulation; bias/ReLU in f32)
    h1 = jnp.dot(w1_ref[...], x_t,
                 preferred_element_type=jnp.float32) + b1_ref[...]
    h1 = jnp.maximum(h1, 0.0)                                     # (36, TB) f32

    # Linear(36, 12) + ReLU
    h2 = jnp.dot(w2_ref[...], h1.astype(w2_ref.dtype),
                 preferred_element_type=jnp.float32) + b2_ref[...]
    h2 = jnp.maximum(h2, 0.0)                                     # (12, TB) f32

    # Linear(12, 1): 1-wide matmul replaced by VPU multiply + sublane (XLU)
    # reduce; result is a lane-dense (1, TB) row -> unmasked stores.
    out_ref[...] = jnp.sum(h2 * w3_ref[...], axis=0, keepdims=True) + b3_ref[...]


def _round_up(n, m):
    return (n + m - 1) // m * m


def neural_network_forward(x, params, *, block_batch=512, compute_dtype=jnp.bfloat16):
    """Forward pass. x: (B, ...) with prod(...) == 6 (nn.Flatten applied here)."""
    B = x.shape[0]
    x2 = x.reshape(B, -1)                      # nn.Flatten
    assert x2.shape[1] == 6, "flattened feature dim must be 6"

    # Batch tile: multiple of 128 lanes, default 512, clamped for small batches.
    tb = min(_round_up(block_batch, 128), _round_up(B, 128))
    b_pad = _round_up(B, tb)
    num_tiles = b_pad // tb

    # Wrapper-side layout plumbing: pad batch, put it on the lane axis.
    x2 = x2.astype(compute_dtype)
    if b_pad != B:
        x2 = jnp.pad(x2, ((0, b_pad - B), (0, 0)))
    x_t = x2.T                                 # (6, b_pad)

    # Weights stay in PyTorch (out_features, in_features) layout.
    w1 = params["w1"].astype(compute_dtype)                    # (36, 6)
    w2 = params["w2"].astype(compute_dtype)                    # (12, 36)
    b1 = params["b1"].reshape(36, 1).astype(jnp.float32)
    b2 = params["b2"].reshape(12, 1).astype(jnp.float32)
    w3 = params["w3"].reshape(12, 1).astype(jnp.float32)       # torch (1,12) -> column (VPU path)
    b3 = params["b3"].reshape(1, 1).astype(jnp.float32)

    const = lambda shape: pl.BlockSpec(shape, lambda i: (0, 0))

    out_t = pl.pallas_call(
        _mlp_kernel,
        out_shape=jax.ShapeDtypeStruct((1, b_pad), jnp.float32),
        grid=(num_tiles,),
        in_specs=[
            pl.BlockSpec((6, tb), lambda i: (0, i)),   # x streams per grid step
            const((36, 6)), const((36, 1)),            # weights/biases: DMA'd once
            const((12, 36)), const((12, 1)),
            const((12, 1)), const((1, 1)),
        ],
        out_specs=pl.BlockSpec((1, tb), lambda i: (0, i)),
        compiler_params=pltpu.CompilerParams(
            dimension_semantics=("parallel",),         # shard batch across TCs on v7x
        ),
    )(x_t, w1, b1, w2, b2, w3, b3)

    return out_t[:, :B].T                              # (B, 1) f32 logits


def init_params(key):
    """Deterministic init with exact nn.Linear shapes: weight (out,in), bias (out,)."""
    ks = jax.random.split(key, 6)

    def uniform(k, shape, fan_in):
        bound = 1.0 / jnp.sqrt(float(fan_in))
        return jax.random.uniform(k, shape, jnp.float32, -bound, bound)

    return {
        "w1": uniform(ks[0], (36, 6), 6),   "b1": uniform(ks[1], (36,), 6),
        "w2": uniform(ks[2], (12, 36), 36), "b2": uniform(ks[3], (12,), 36),
        "w3": uniform(ks[4], (1, 12), 12),  "b3": uniform(ks[5], (1,), 12),
    }


def reference_forward(x, p, compute_dtype=jnp.float32):
    """Plain-JAX reference with PyTorch semantics (x @ W.T + b); layer 3 done
    elementwise in exact f32 to mirror the kernel's VPU path."""
    cd = compute_dtype
    x2 = x.reshape(x.shape[0], -1)
    h1 = jnp.maximum(
        jnp.dot(x2.astype(cd), p["w1"].T.astype(cd),
                preferred_element_type=jnp.float32) + p["b1"], 0.0)
    h2 = jnp.maximum(
        jnp.dot(h1.astype(cd), p["w2"].T.astype(cd),
                preferred_element_type=jnp.float32) + p["b2"], 0.0)
    return jnp.sum(h2 * p["w3"], axis=-1, keepdims=True) + p["b3"]


if __name__ == "__main__":
    key = jax.random.PRNGKey(0)
    k_params, k_x1, k_x2 = jax.random.split(key, 3)
    params = init_params(k_params)

    # Small input consistent with the module: (batch, 2, 3) -> Flatten -> (batch, 6).
    x_small = jax.random.normal(k_x1, (8, 2, 3), jnp.float32)

    # f32 path: bit-faithful module semantics, single (clamped) tile.
    out_f32 = jax.block_until_ready(
        neural_network_forward(x_small, params, compute_dtype=jnp.float32))
    ref_f32 = reference_forward(x_small, params, compute_dtype=jnp.float32)
    assert out_f32.shape == (8, 1)
    assert jnp.allclose(out_f32, ref_f32, atol=2e-5, rtol=2e-5), "f32 mismatch vs reference"

    # Default bf16-fed MXU path on a larger batch: exercises the multi-tile
    # parallel grid (tb=512, 2 grid steps). Reference uses identical bf16 casts,
    # so the tolerance only needs to absorb accumulation-order differences.
    x_big = jax.random.normal(k_x2, (1024, 2, 3), jnp.float32)
    out_bf16 = jax.block_until_ready(neural_network_forward(x_big, params))
    ref_bf16 = reference_forward(x_big, params, compute_dtype=jnp.bfloat16)
    assert out_bf16.shape == (1024, 1)
    assert jnp.allclose(out_bf16, ref_bf16, atol=1e-3, rtol=1e-3), "bf16 mismatch vs reference"

    print("KERNEL_OK")
</pallas_src>

<mosaic_0001>
module attributes {stable_mosaic.version = 11 : i64} {
  func.func @_mlp_kernel(%arg0: i32, %arg1: memref<6x128xf32, #tpu.memory_space<vmem>>, %arg2: memref<36x6xf32, #tpu.memory_space<vmem>>, %arg3: memref<36x1xf32, #tpu.memory_space<vmem>>, %arg4: memref<12x36xf32, #tpu.memory_space<vmem>>, %arg5: memref<12x1xf32, #tpu.memory_space<vmem>>, %arg6: memref<12x1xf32, #tpu.memory_space<vmem>>, %arg7: memref<1x1xf32, #tpu.memory_space<vmem>>, %arg8: memref<1x128xf32, #tpu.memory_space<vmem>>) attributes {dimension_semantics = [#tpu.dimension_semantics<parallel>], iteration_bounds = array<i64: 1>, scalar_prefetch = 0 : i64, scratch_operands = 0 : i64, tpu.core_type = #tpu.core_type<tc>, window_params = [{transform_indices = @transform_0, window_bounds = array<i64: 6, 128>}, {pipeline_mode = #tpu.pipeline_mode<synchronous>, transform_indices = @transform_1, window_bounds = array<i64: 36, 6>}, {pipeline_mode = #tpu.pipeline_mode<synchronous>, transform_indices = @transform_2, window_bounds = array<i64: 36, 1>}, {pipeline_mode = #tpu.pipeline_mode<synchronous>, transform_indices = @transform_3, window_bounds = array<i64: 12, 36>}, {pipeline_mode = #tpu.pipeline_mode<synchronous>, transform_indices = @transform_4, window_bounds = array<i64: 12, 1>}, {pipeline_mode = #tpu.pipeline_mode<synchronous>, transform_indices = @transform_5, window_bounds = array<i64: 12, 1>}, {pipeline_mode = #tpu.pipeline_mode<synchronous>, transform_indices = @transform_6, window_bounds = array<i64: 1, 1>}, {transform_indices = @transform_7, window_bounds = array<i64: 1, 128>}]} {
    %c0 = arith.constant 0 : index
    %c0_0 = arith.constant 0 : index
    %0 = vector.load %arg1[%c0, %c0_0] : memref<6x128xf32, #tpu.memory_space<vmem>>, vector<6x128xf32>
    %c0_1 = arith.constant 0 : index
    %c0_2 = arith.constant 0 : index
    %1 = vector.load %arg2[%c0_1, %c0_2] : memref<36x6xf32, #tpu.memory_space<vmem>>, vector<36x6xf32>
    %cst = arith.constant dense<0.000000e+00> : vector<36x128xf32>
    %2 = tpu.matmul %1, %0, %cst {dimension_numbers = #tpu.dot_dimension_numbers<[1], [0], [0], [1], [0, 0, 1, 1], [], []>} : vector<36x6xf32>, vector<6x128xf32>, vector<36x128xf32> -> vector<36x128xf32>
    %c0_3 = arith.constant 0 : index
    %c0_4 = arith.constant 0 : index
    %3 = vector.load %arg3[%c0_3, %c0_4] : memref<36x1xf32, #tpu.memory_space<vmem>>, vector<36x1xf32>
    %4 = vector.broadcast %3 : vector<36x1xf32> to vector<36x128xf32>
    %5 = arith.addf %2, %4 : vector<36x128xf32>
    %cst_5 = arith.constant 0.000000e+00 : f32
    %6 = vector.broadcast %cst_5 : f32 to vector<36x128xf32>
    %7 = arith.maximumf %5, %6 : vector<36x128xf32>
    %c0_6 = arith.constant 0 : index
    %c0_7 = arith.constant 0 : index
    %8 = vector.load %arg4[%c0_6, %c0_7] : memref<12x36xf32, #tpu.memory_space<vmem>>, vector<12x36xf32>
    %cst_8 = arith.constant dense<0.000000e+00> : vector<12x128xf32>
    %9 = tpu.matmul %8, %7, %cst_8 {dimension_numbers = #tpu.dot_dimension_numbers<[1], [0], [0], [1], [0, 0, 1, 1], [], []>} : vector<12x36xf32>, vector<36x128xf32>, vector<12x128xf32> -> vector<12x128xf32>
    %c0_9 = arith.constant 0 : index
    %c0_10 = arith.constant 0 : index
    %10 = vector.load %arg5[%c0_9, %c0_10] : memref<12x1xf32, #tpu.memory_space<vmem>>, vector<12x1xf32>
    %11 = vector.broadcast %10 : vector<12x1xf32> to vector<12x128xf32>
    %12 = arith.addf %9, %11 : vector<12x128xf32>
    %cst_11 = arith.constant 0.000000e+00 : f32
    %13 = vector.broadcast %cst_11 : f32 to vector<12x128xf32>
    %14 = arith.maximumf %12, %13 : vector<12x128xf32>
    %c0_12 = arith.constant 0 : index
    %c0_13 = arith.constant 0 : index
    %15 = vector.load %arg6[%c0_12, %c0_13] : memref<12x1xf32, #tpu.memory_space<vmem>>, vector<12x1xf32>
    %16 = vector.broadcast %15 : vector<12x1xf32> to vector<12x128xf32>
    %17 = arith.mulf %14, %16 : vector<12x128xf32>
    %cst_14 = arith.constant dense<0.000000e+00> : vector<128xf32>
    %18 = vector.multi_reduction <add>, %17, %cst_14 [0] : vector<12x128xf32> to vector<128xf32>
    %19 = vector.shape_cast %18 : vector<128xf32> to vector<1x128xf32>
    %c0_15 = arith.constant 0 : index
    %c0_16 = arith.constant 0 : index
    %20 = vector.load %arg7[%c0_15, %c0_16] : memref<1x1xf32, #tpu.memory_space<vmem>>, vector<1x1xf32>
    %21 = vector.broadcast %20 : vector<1x1xf32> to vector<1x128xf32>
    %22 = arith.addf %19, %21 : vector<1x128xf32>
    %c0_17 = arith.constant 0 : index
    %c0_18 = arith.constant 0 : index
    %23 = vector.load %arg8[%c0_17, %c0_18] : memref<1x128xf32, #tpu.memory_space<vmem>>, vector<1x128xf32>
    tpu.vector_store %arg8[%c0_17, %c0_18], %22 {strides = array<i32>} : memref<1x128xf32, #tpu.memory_space<vmem>>, vector<1x128xf32>,
    return
  }
  func.func @transform_0(%arg0: i32) -> (i32, i32) {
    %c0_i32 = arith.constant 0 : i32
    %c0_i32_0 = arith.constant 0 : i32
    return %c0_i32, %arg0 : i32, i32
  }
  func.func @transform_1(%arg0: i32) -> (i32, i32) {
    %c0_i32 = arith.constant 0 : i32
    %c0_i32_0 = arith.constant 0 : i32
    %c0_i32_1 = arith.constant 0 : i32
    return %c0_i32, %c0_i32_0 : i32, i32
  }
  func.func @transform_2(%arg0: i32) -> (i32, i32) {
    %c0_i32 = arith.constant 0 : i32
    %c0_i32_0 = arith.constant 0 : i32
    %c0_i32_1 = arith.constant 0 : i32
    return %c0_i32, %c0_i32_0 : i32, i32
  }
  func.func @transform_3(%arg0: i32) -> (i32, i32) {
    %c0_i32 = arith.constant 0 : i32
    %c0_i32_0 = arith.constant 0 : i32
    %c0_i32_1 = arith.constant 0 : i32
    return %c0_i32, %c0_i32_0 : i32, i32
  }
  func.func @transform_4(%arg0: i32) -> (i32, i32) {
    %c0_i32 = arith.constant 0 : i32
    %c0_i32_0 = arith.constant 0 : i32
    %c0_i32_1 = arith.constant 0 : i32
    return %c0_i32, %c0_i32_0 : i32, i32
  }
  func.func @transform_5(%arg0: i32) -> (i32, i32) {
    %c0_i32 = arith.constant 0 : i32
    %c0_i32_0 = arith.constant 0 : i32
    %c0_i32_1 = arith.constant 0 : i32
    return %c0_i32, %c0_i32_0 : i32, i32
  }
  func.func @transform_6(%arg0: i32) -> (i32, i32) {
    %c0_i32 = arith.constant 0 : i32
    %c0_i32_0 = arith.constant 0 : i32
    %c0_i32_1 = arith.constant 0 : i32
    return %c0_i32, %c0_i32_0 : i32, i32
  }
  func.func @transform_7(%arg0: i32) -> (i32, i32) {
    %c0_i32 = arith.constant 0 : i32
    %c0_i32_0 = arith.constant 0 : i32
    return %c0_i32, %arg0 : i32, i32
  }
}

</mosaic_0001>

<llo_original>
// kernel: tpu_custom_call.1
$region0: #{tpu_custom_call.1}
  #allocation0 [shape = 'u32[]', space=smem, size = 0x4, offset = 0x4, fixed_abs, tag = 'smem constant byte address 0x4 - core index']
  #allocation1 [shape = 'u32[144,128]{1,0:T(1,128)}', space=vmem, size = 0x12000, scoped, tag = 'internal scratch']
  #allocation2 [shape = 'f32[1,1]{1,0:T(1,128)S(1)}', space=vmem, size = 0x200, scoped, tag = 'scoped memory for tpu_custom_call.1']
  %s0 = inlined_call_operand.vmem [shape: f32[6,128], index: 0, kind: input, shape index: {}]
  %s1 = inlined_call_operand.vmem [shape: f32[36,6], index: 1, kind: input, shape index: {}]
  %s2 = inlined_call_operand.vmem [shape: f32[36,1], index: 2, kind: input, shape index: {}]
  %s3 = inlined_call_operand.vmem [shape: f32[12,36], index: 3, kind: input, shape index: {}]
  %s4 = inlined_call_operand.vmem [shape: f32[12,1], index: 4, kind: input, shape index: {}]
  %s5 = inlined_call_operand.vmem [shape: f32[12,1], index: 5, kind: input, shape index: {}]
  %s6 = inlined_call_operand.<no memory space> [shape: f32[1,1], index: 6, kind: input, shape index: {}]
  %s7 = inlined_call_operand.hbm [shape: f32[1,128], index: 7, kind: output, shape index: {}]
  %s8 = sld [smem:[#allocation0]]
  $region38: #{tpu_custom_call.1} parent=0
    _
  %s10 = ssub.s32 1, %s8
  %s11 = scalar_select 0, %s10, %s8
  %v12 = vstv %s6
  %13 = vst [vmem:[#allocation2] sm:$0x1] %v12
  $region1: #{tpu_custom_call.1} parent=0
    #allocation3 [shape = 'u8[512]{0}', space=vmem, size = 0x400, scoped, tag = 'output window, operand 0, single buffered']
    #allocation4 [shape = 's32[1]{0}', space=sflag, size = 0x4, scoped, tag = 'scoped memory for tpu_custom_call.1']
    %14 = vsyncpa [#allocation4], 0
    // Predicated region
    $region2: #{tpu_custom_call.1} parent=1 // pred_check
      _
    $region3: #{tpu_custom_call.1} parent=1 // pred_check_branch
      %16 = sbr.rel (0) target = $region5
    $region4: #{tpu_custom_call.1} parent=1 // pred_region
      _
    $region5: #{tpu_custom_call.1} parent=1 // pred_fallthru
      _
    // Predicated region
    $region6: #{tpu_custom_call.1} parent=1 // pred_check
      _
    $region7: #{tpu_custom_call.1} parent=1 // pred_check_branch
      %18 = sbr.rel (0) target = $region9
    $region8: #{tpu_custom_call.1} parent=1 // pred_region
      _
    $region9: #{tpu_custom_call.1} parent=1 // pred_fallthru
      _
    // Predicated region
    $region10: #{tpu_custom_call.1} parent=1 // pred_check
      _
    $region11: #{tpu_custom_call.1} parent=1 // pred_check_branch
      %20 = sbr.rel (0) target = $region13
    $region12: #{tpu_custom_call.1} parent=1 // pred_region
      _
    $region13: #{tpu_custom_call.1} parent=1 // pred_fallthru
      _
    // Predicated region
    $region14: #{tpu_custom_call.1} parent=1 // pred_check
      _
    $region15: #{tpu_custom_call.1} parent=1 // pred_check_branch
      %22 = sbr.rel (0) target = $region17
    $region16: #{tpu_custom_call.1} parent=1 // pred_region
      _
    $region17: #{tpu_custom_call.1} parent=1 // pred_fallthru
      _
    // Predicated region
    $region18: #{tpu_custom_call.1} parent=1 // pred_check
      _
    $region19: #{tpu_custom_call.1} parent=1 // pred_check_branch
      %24 = sbr.rel (0) target = $region21
    $region20: #{tpu_custom_call.1} parent=1 // pred_region
      _
    $region21: #{tpu_custom_call.1} parent=1 // pred_fallthru
      _
    // Predicated region
    $region22: #{tpu_custom_call.1} parent=1 // pred_check
      _
    $region23: #{tpu_custom_call.1} parent=1 // pred_check_branch
      %26 = sbr.rel (0) target = $region25
    $region24: #{tpu_custom_call.1} parent=1 // pred_region
      _
    $region25: #{tpu_custom_call.1} parent=1 // pred_fallthru
      _
    // Predicated region
    $region26: #{tpu_custom_call.1} parent=1 // pred_check
      _
    $region27: #{tpu_custom_call.1} parent=1 // pred_check_branch
      %28 = sbr.rel (0) target = $region29
    $region28: #{tpu_custom_call.1} parent=1 // pred_region
      _
    $region29: #{tpu_custom_call.1} parent=1 // pred_fallthru
      _
    %v29 = vld [vmem:[%s0] sm:$0x3f]
    %v30 = vld [vmem:[%s1] sm:$0xff]
    %v31 = vld [vmem:[%s1 + $0x8] sm:$0xff]
    %v32 = vld [vmem:[%s1 + $0x10] sm:$0xff]
    %v33 = vld [vmem:[%s1 + $0x18] sm:$0xff]
    %v34 = vld [vmem:[%s1 + $0x20] sm:$0xf]
    %v35 = vld [vmem:[%s2] sm:$0xff]
    %v36 = vld [vmem:[%s2 + $0x8] sm:$0xff]
    %v37 = vld [vmem:[%s2 + $0x10] sm:$0xff]
    %v38 = vld [vmem:[%s2 + $0x18] sm:$0xff]
    %v39 = vld [vmem:[%s2 + $0x20] sm:$0xf]
    %41 = vset.pattern.permute.xlu0 0
    %42 = vperm.xlu0 %41, %v35
    %v43 = vpop.permute.xlu0 %42
    %46 = vset.pattern.permute.xlu0 0
    %47 = vperm.xlu0 %46, %v36
    %v48 = vpop.permute.xlu0 %47
    %51 = vset.pattern.permute.xlu0 0
    %52 = vperm.xlu0 %51, %v37
    %v53 = vpop.permute.xlu0 %52
    %56 = vset.pattern.permute.xlu0 0
    %57 = vperm.xlu0 %56, %v38
    %v58 = vpop.permute.xlu0 %57
    %61 = vset.pattern.permute.xlu0 0
    %62 = vperm.xlu0 %61, %v39
    %v63 = vpop.permute.xlu0 %62
    %vm65 = vcmask 48128
    %v67 = vsel %vm65, %v30, 0
    %v70 = vsel %vm65, %v31, 0
    %v73 = vsel %vm65, %v32, 0
    %v76 = vsel %vm65, %v33, 0
    %v79 = vsel %vm65, %v34, 0
    %vm81 = vcmask 1045504
    %v83 = vsel %vm81, %v29, 0
    %85 = vmatprep.subr.mxu0 0.0
    %86 = vmatpush1.msra.mxu0 %v83
    %87 = vmatprep.subr.mxu0 0.0
    %88 = vmatpush1.msra.mxu0 0.0
    %89 = vmatprep.subr.mxu0 0.0
    %90 = vmatpush1.msra.mxu0 0.0
    %91 = vmatprep.subr.mxu0 0.0
    %92 = vmatpush1.msra.mxu0 0.0
    %93 = vmatprep.subr.mxu0 0.0
    %94 = vmatpush1.msra.mxu0 0.0
    %95 = vmatprep.subr.mxu0 0.0
    %96 = vmatpush1.msra.mxu0 0.0
    %97 = vmatprep.subr.mxu0 0.0
    %98 = vmatpush1.msra.mxu0 0.0
    %99 = vmatprep.subr.mxu0 0.0
    %100 = vmatpush1.msra.mxu0 0.0
    %101 = vmatprep.subr.mxu0 0.0
    %102 = vmatpush1.msra.mxu0 0.0
    %103 = vmatprep.subr.mxu0 0.0
    %104 = vmatpush1.msra.mxu0 0.0
    %105 = vmatprep.subr.mxu0 0.0
    %106 = vmatpush1.msra.mxu0 0.0
    %107 = vmatprep.subr.mxu0 0.0
    %108 = vmatpush1.msra.mxu0 0.0
    %109 = vmatprep.subr.mxu0 0.0
    %110 = vmatpush1.msra.mxu0 0.0
    %111 = vmatprep.subr.mxu0 0.0
    %112 = vmatpush1.msra.mxu0 0.0
    %113 = vmatprep.subr.mxu0 0.0
    %114 = vmatpush1.msra.mxu0 0.0
    %115 = vmatprep.subr.mxu0 0.0
    %116 = vmatpush1.msra.mxu0 0.0
    %117 = vmatprep.subr.mxu0 0.0
    %118 = vmatpush1.msra.mxu0 0.0
    %119 = vmatprep.subr.mxu0 0.0
    %120 = vmatpush1.msra.mxu0 0.0
    %121 = vmatprep.subr.mxu0 0.0
    %122 = vmatpush1.msra.mxu0 0.0
    %123 = vmatprep.subr.mxu0 0.0
    %124 = vmatpush1.msra.mxu0 0.0
    %125 = vmatprep.subr.mxu0 0.0
    %126 = vmatpush1.msra.mxu0 0.0
    %127 = vmatprep.subr.mxu0 0.0
    %128 = vmatpush1.msra.mxu0 0.0
    %129 = vmatprep.subr.mxu0 0.0
    %130 = vmatpush1.msra.mxu0 0.0
    %131 = vmatprep.subr.mxu0 0.0
    %132 = vmatpush1.msra.mxu0 0.0
    %133 = vmatprep.subr.mxu0 0.0
    %134 = vmatpush1.msra.mxu0 0.0
    %135 = vmatprep.subr.mxu0 0.0
    %136 = vmatpush1.msra.mxu0 0.0
    %137 = vmatprep.subr.mxu0 0.0
    %138 = vmatpush1.msra.mxu0 0.0
    %139 = vmatprep.subr.mxu0 0.0
    %140 = vmatpush1.msra.mxu0 0.0
    %141 = vmatprep.subr.mxu0 0.0
    %142 = vmatpush1.msra.mxu0 0.0
    %143 = vmatprep.subr.mxu0 0.0
    %144 = vmatpush1.msra.mxu0 0.0
    %145 = vmatprep.subr.mxu0 0.0
    %146 = vmatpush1.msra.mxu0 0.0
    %147 = vmatprep.subr.mxu0 0.0
    %148 = vmatpush1.msra.mxu0 0.0
    %149 = vmatprep.mubr.f32.mxu0 0.0
    %150 = vmatmul.mubr.f32.gmra.mrb[0].mxu0 %v67
    %v151 = vpop.f32.mrb[0].mxu0
    %v152 = vadd.f32 %v43, %v151
    %v153 = vpop.f32.mrb[0].mxu0
    %154 = vmatprep.mubr.f32.mxu0 0.0
    %155 = vmatmul.mubr.f32.gmra.mrb[0].mxu0 %v70
    %v156 = vpop.f32.mrb[0].mxu0
    %v157 = vadd.f32 %v48, %v156
    %v158 = vpop.f32.mrb[0].mxu0
    %159 = vmatprep.mubr.f32.mxu0 0.0
    %160 = vmatmul.mubr.f32.gmra.mrb[0].mxu0 %v73
    %v161 = vpop.f32.mrb[0].mxu0
    %v162 = vadd.f32 %v53, %v161
    %v163 = vpop.f32.mrb[0].mxu0
    %164 = vmatprep.mubr.f32.mxu0 0.0
    %165 = vmatmul.mubr.f32.gmra.mrb[0].mxu0 %v76
    %v166 = vpop.f32.mrb[0].mxu0
    %v167 = vadd.f32 %v58, %v166
    %v168 = vpop.f32.mrb[0].mxu0
    %169 = vmatprep.mubr.f32.mxu0 0.0
    %170 = vmatmul.mubr.f32.gmra.mrb[0].mxu0 %v79
    %v171 = vpop.f32.mrb[0].mxu0
    %v172 = vadd.f32 %v63, %v171
    %v173 = vpop.f32.mrb[0].mxu0
    %174 = vdwg.mxu0
    %v175 = vmax.f32 %v152, 0.0
    %v176 = vmax.f32 %v157, 0.0
    %v177 = vmax.f32 %v162, 0.0
    %v178 = vmax.f32 %v167, 0.0
    %v179 = vmax.f32 %v172, 0.0
    %v180 = vld [vmem:[%s3] sm:$0xff]
    %v181 = vld [vmem:[%s3 + $0x8] sm:$0xf]
    %v182 = vld [vmem:[%s4] sm:$0xff]
    %v183 = vld [vmem:[%s4 + $0x8] sm:$0xf]
    %185 = vset.pattern.permute.xlu0 0
    %186 = vperm.xlu0 %185, %v182
    %v187 = vpop.permute.xlu0 %186
    %190 = vset.pattern.permute.xlu0 0
    %191 = vperm.xlu0 %190, %v183
    %v192 = vpop.permute.xlu0 %191
    %vm194 = vcmask 293888
    %v196 = vsel %vm194, %v180, 0
    %v199 = vsel %vm194, %v181, 0
    %vm201 = vcmask 1043456
    %v203 = vsel %vm201, %v179, 0
    %205 = vmatprep.subr.mxu0 0.0
    %206 = vmatpush1.msra.mxu0 %v175
    %207 = vmatprep.subr.mxu0 0.0
    %208 = vmatpush1.msra.mxu0 %v176
    %209 = vmatprep.subr.mxu0 0.0
    %210 = vmatpush1.msra.mxu0 %v177
    %211 = vmatprep.subr.mxu0 0.0
    %212 = vmatpush1.msra.mxu0 %v178
    %213 = vmatprep.subr.mxu0 0.0
    %214 = vmatpush1.msra.mxu0 %v203
    %215 = vmatprep.subr.mxu0 0.0
    %216 = vmatpush1.msra.mxu0 0.0
    %217 = vmatprep.subr.mxu0 0.0
    %218 = vmatpush1.msra.mxu0 0.0
    %219 = vmatprep.subr.mxu0 0.0
    %220 = vmatpush1.msra.mxu0 0.0
    %221 = vmatprep.subr.mxu0 0.0
    %222 = vmatpush1.msra.mxu0 0.0
    %223 = vmatprep.subr.mxu0 0.0
    %224 = vmatpush1.msra.mxu0 0.0
    %225 = vmatprep.subr.mxu0 0.0
    %226 = vmatpush1.msra.mxu0 0.0
    %227 = vmatprep.subr.mxu0 0.0
    %228 = vmatpush1.msra.mxu0 0.0
    %229 = vmatprep.subr.mxu0 0.0
    %230 = vmatpush1.msra.mxu0 0.0
    %231 = vmatprep.subr.mxu0 0.0
    %232 = vmatpush1.msra.mxu0 0.0
    %233 = vmatprep.subr.mxu0 0.0
    %234 = vmatpush1.msra.mxu0 0.0
    %235 = vmatprep.subr.mxu0 0.0
    %236 = vmatpush1.msra.mxu0 0.0
    %237 = vmatprep.subr.mxu0 0.0
    %238 = vmatpush1.msra.mxu0 0.0
    %239 = vmatprep.subr.mxu0 0.0
    %240 = vmatpush1.msra.mxu0 0.0
    %241 = vmatprep.subr.mxu0 0.0
    %242 = vmatpush1.msra.mxu0 0.0
    %243 = vmatprep.subr.mxu0 0.0
    %244 = vmatpush1.msra.mxu0 0.0
    %245 = vmatprep.subr.mxu0 0.0
    %246 = vmatpush1.msra.mxu0 0.0
    %247 = vmatprep.subr.mxu0 0.0
    %248 = vmatpush1.msra.mxu0 0.0
    %249 = vmatprep.subr.mxu0 0.0
    %250 = vmatpush1.msra.mxu0 0.0
    %251 = vmatprep.subr.mxu0 0.0
    %252 = vmatpush1.msra.mxu0 0.0
    %253 = vmatprep.subr.mxu0 0.0
    %254 = vmatpush1.msra.mxu0 0.0
    %255 = vmatprep.subr.mxu0 0.0
    %256 = vmatpush1.msra.mxu0 0.0
    %257 = vmatprep.subr.mxu0 0.0
    %258 = vmatpush1.msra.mxu0 0.0
    %259 = vmatprep.subr.mxu0 0.0
    %260 = vmatpush1.msra.mxu0 0.0
    %261 = vmatprep.subr.mxu0 0.0
    %262 = vmatpush1.msra.mxu0 0.0
    %263 = vmatprep.subr.mxu0 0.0
    %264 = vmatpush1.msra.mxu0 0.0
    %265 = vmatprep.subr.mxu0 0.0
    %266 = vmatpush1.msra.mxu0 0.0
    %267 = vmatprep.subr.mxu0 0.0
    %268 = vmatpush1.msra.mxu0 0.0
    %269 = vmatprep.mubr.f32.mxu0 0.0
    %270 = vmatmul.mubr.f32.gmra.mrb[0].mxu0 %v196
    %v271 = vpop.f32.mrb[0].mxu0
    %v272 = vadd.f32 %v187, %v271
    %v273 = vpop.f32.mrb[0].mxu0
    %274 = vmatprep.mubr.f32.mxu0 0.0
    %275 = vmatmul.mubr.f32.gmra.mrb[0].mxu0 %v199
    %v276 = vpop.f32.mrb[0].mxu0
    %v277 = vadd.f32 %v192, %v276
    %v278 = vpop.f32.mrb[0].mxu0
    %279 = vdwg.mxu0
    %v280 = vmax.f32 %v272, 0.0
    %v281 = vmax.f32 %v277, 0.0
    %v282 = vld [vmem:[%s5] sm:$0xff]
    %v283 = vld [vmem:[%s5 + $0x8] sm:$0xf]
    %285 = vset.pattern.permute.xlu0 0
    %286 = vperm.xlu0 %285, %v282
    %v287 = vpop.permute.xlu0 %286
    %290 = vset.pattern.permute.xlu0 0
    %291 = vperm.xlu0 %290, %v283
    %v292 = vpop.permute.xlu0 %291
    %v294 = vmul.f32 %v280, %v287
    %v295 = vmul.f32 %v281, %v292
    %v296 = vsel %vm201, %v295, 0.0
    %v297 = vadd.f32 %v294, %v296
    %v298 = vrot.slane %v297, 4
    %v299 = vadd.f32 %v297, %v298
    %v300 = vrot.slane %v299, 2
    %v301 = vadd.f32 %v299, %v300
    %v302 = vrot.slane %v301, 1
    %v303 = vadd.f32 %v301, %v302
    %v304 = vld [vmem:[#allocation2] sm:$0x1]
    %306 = vset.pattern.permute.xlu0 0
    %307 = vperm.xlu0 %306, %v304
    %v308 = vpop.permute.xlu0 %307
    %v310 = vlaneseq
    %v311 = vshrl.u32 %v310, 7
    %v312 = vsub.s32 0, %v311
    %v313 = vrot.slane %v308, %v312
    %v314 = vadd.f32 %v303, %v313
    %315 = vst [vmem:[#allocation3] sm:$0x1] %v314
    // Predicated region
    $region30: #{tpu_custom_call.1} parent=1 // pred_check
      _
    $region31: #{tpu_custom_call.1} parent=1 // pred_check_branch
      %317 = sbr.rel (0) target = $region33
    $region32: #{tpu_custom_call.1} parent=1 // pred_region
      %s319 = ssub.s32 16, 16
      %320 = vsyncadd [#allocation4], %s319
      %s322 = sshll.u32 [#allocation3], 4
      %s323 = int_to_ptr.vmem [resolvable:$true] %s322
      %325 = dma.vmem_to_hbm [thread:$0]  %s323, 16, %s7, [#allocation4]
    $region33: #{tpu_custom_call.1} parent=1 // pred_fallthru
      _
    // Predicated region
    $region34: #{tpu_custom_call.1} parent=1 // pred_check
      _
    $region35: #{tpu_custom_call.1} parent=1 // pred_check_branch
      %327 = sbr.rel (0) target = $region37
    $region36: #{tpu_custom_call.1} parent=1 // pred_region
      %328 = dma.done [#allocation4], 16
    $region37: #{tpu_custom_call.1} parent=1 // pred_fallthru
      _
    %329 = vsyncpa [#allocation4], 1

</llo_original>
